<compile_context>
chip_gen: v5e
topology: v5e:2x2
jax: 0.10.0
libtpu: 0.0.40
codegen_flags: <defaults>
</compile_context>

<pallas_src>
import functools
import numpy as np

import jax
import jax.numpy as jnp
from jax.experimental import pallas as pl
from jax.experimental.pallas import tpu as pltpu


_VMEM_LIMIT = 64 << 20  # fits v7x's 64 MiB physical VMEM; well above v5e/v6e scoped default


# ----------------------------------------------------------------------------
# tiling helpers
# ----------------------------------------------------------------------------
def _pick_tile_m(M, desired):
    """Largest legal row tile <= desired that divides M (avoids jnp.pad copies)."""
    if M <= desired:
        return M                       # full extent -> always a legal block dim
    for t in (desired, 512, 256, 128, 64, 32, 16, 8):
        if t <= desired and M % t == 0:
            return t
    return None                        # caller pads (rare)


def _pick_tile_n(N, desired):
    if N <= desired:
        return N
    for t in (desired, 512, 256, 128):
        if t <= desired and N % t == 0:
            return t
    return N                           # full extent fallback


# ----------------------------------------------------------------------------
# fused matmul + bias + activation
# ----------------------------------------------------------------------------
def _linear_kernel(x_ref, w_ref, b_ref, o_ref, *, act):
    x = x_ref[...].astype(jnp.bfloat16)
    y = jnp.dot(x, w_ref[...], preferred_element_type=jnp.float32)
    y = y + b_ref[...]
    if act == "tanh":
        y = jnp.tanh(y)
    elif act == "gelu":
        # TODO(synk): HF BERT default is the exact erf GELU; tanh approximation kept
        # here for lowering robustness (small numeric drift).
        y = jax.nn.gelu(y, approximate=True)
    o_ref[...] = y.astype(o_ref.dtype)


def pallas_linear(x, w, b, act=None, tile_m=256, tile_n=512):
    """y = act(x @ w + b); x:[M,K] f32, w:[K,N] bf16, b:[N] f32 -> [M,N] f32."""
    M, K = x.shape
    N = w.shape[1]
    tm = _pick_tile_m(M, tile_m)
    if tm is None:
        pad = (-M) % tile_m
        x = jnp.pad(x, ((0, pad), (0, 0)))
        tm = tile_m
    Mp = x.shape[0]
    tn = _pick_tile_n(N, tile_n)

    out = pl.pallas_call(
        functools.partial(_linear_kernel, act=act),
        out_shape=jax.ShapeDtypeStruct((Mp, N), jnp.float32),
        grid=(Mp // tm, N // tn),
        in_specs=[
            pl.BlockSpec((tm, K), lambda i, j: (i, 0)),
            pl.BlockSpec((K, tn), lambda i, j: (0, j)),
            pl.BlockSpec((1, tn), lambda i, j: (0, j)),
        ],
        out_specs=pl.BlockSpec((tm, tn), lambda i, j: (i, j)),
        compiler_params=pltpu.CompilerParams(
            dimension_semantics=("parallel", "parallel"),
            vmem_limit_bytes=_VMEM_LIMIT),
    )(x, w, b.reshape(1, N))
    return out[:M] if Mp != M else out


# ----------------------------------------------------------------------------
# LayerNorm (optionally fused with residual add)
# ----------------------------------------------------------------------------
def _ln_core(x, g, b, eps):
    mu = jnp.mean(x, axis=-1, keepdims=True)
    var = jnp.mean(jnp.square(x - mu), axis=-1, keepdims=True)
    return (x - mu) * jax.lax.rsqrt(var + eps) * g + b


def _ln_kernel(x_ref, g_ref, b_ref, o_ref, *, eps):
    o_ref[...] = _ln_core(x_ref[...], g_ref[...], b_ref[...], eps)


def _ln_res_kernel(a_ref, r_ref, g_ref, b_ref, o_ref, *, eps):
    o_ref[...] = _ln_core(a_ref[...] + r_ref[...], g_ref[...], b_ref[...], eps)


def pallas_layernorm(x, g, b, residual=None, eps=1e-12, tile_m=512):
    """LayerNorm(x [+ residual]) over the last dim; x:[M,H] f32."""
    M, H = x.shape
    inputs = [x] if residual is None else [x, residual]
    tm = _pick_tile_m(M, tile_m)
    if tm is None:
        pad = (-M) % tile_m
        inputs = [jnp.pad(t, ((0, pad), (0, 0))) for t in inputs]
        tm = tile_m
    Mp = inputs[0].shape[0]

    row_spec = pl.BlockSpec((tm, H), lambda i: (i, 0))
    vec_spec = pl.BlockSpec((1, H), lambda i: (0, 0))
    kern = functools.partial(_ln_kernel if residual is None else _ln_res_kernel, eps=eps)
    out = pl.pallas_call(
        kern,
        out_shape=jax.ShapeDtypeStruct((Mp, H), jnp.float32),
        grid=(Mp // tm,),
        in_specs=[row_spec] * len(inputs) + [vec_spec, vec_spec],
        out_specs=row_spec,
        compiler_params=pltpu.CompilerParams(
            dimension_semantics=("parallel",),
            vmem_limit_bytes=_VMEM_LIMIT),
    )(*inputs, g.reshape(1, H), b.reshape(1, H))
    return out[:M] if Mp != M else out


# ----------------------------------------------------------------------------
# multi-head attention: per-batch lane-dense blocks, in-kernel head loop
# ----------------------------------------------------------------------------
def _attn_kernel(q_ref, k_ref, v_ref, bias_ref, o_ref, *, num_heads, scale):
    q = q_ref[0]                 # [L, H] f32
    k = k_ref[0]
    v = v_ref[0]
    bias = bias_ref[0]           # [1, L] additive mask bias
    H = q.shape[-1]
    dh = H // num_heads

    ctx = []
    for h in range(num_heads):   # static loop; head slices are static lane slices
        lo, hi = h * dh, (h + 1) * dh
        qh = (q[:, lo:hi] * scale).astype(jnp.bfloat16)
        kh = k[:, lo:hi].astype(jnp.bfloat16)
        vh = v[:, lo:hi].astype(jnp.bfloat16)
        s = jnp.dot(qh, kh.T, preferred_element_type=jnp.float32) + bias
        s = s - jnp.max(s, axis=-1, keepdims=True)
        p = jnp.exp(s)
        inv = pl.reciprocal(jnp.sum(p, axis=-1, keepdims=True), approx=True)
        ch = jnp.dot(p.astype(jnp.bfloat16), vh, preferred_element_type=jnp.float32) * inv
        ctx.append(ch)
    o_ref[0] = jnp.concatenate(ctx, axis=-1)      # lane-dense [L, H] store


def pallas_attention(q, k, v, mask_bias, num_heads):
    """q,k,v: [B, L, H] f32; mask_bias: [B, 1, L] f32 -> context [B, L, H] f32."""
    B, L, H = q.shape
    dh = H // num_heads
    scale = 1.0 / float(np.sqrt(dh))
    return pl.pallas_call(
        functools.partial(_attn_kernel, num_heads=num_heads, scale=scale),
        out_shape=jax.ShapeDtypeStruct((B, L, H), jnp.float32),
        grid=(B,),
        in_specs=[
            pl.BlockSpec((1, L, H), lambda i: (i, 0, 0)),
            pl.BlockSpec((1, L, H), lambda i: (i, 0, 0)),
            pl.BlockSpec((1, L, H), lambda i: (i, 0, 0)),
            pl.BlockSpec((1, 1, L), lambda i: (i, 0, 0)),
        ],
        out_specs=pl.BlockSpec((1, L, H), lambda i: (i, 0, 0)),
        compiler_params=pltpu.CompilerParams(
            dimension_semantics=("parallel",),
            vmem_limit_bytes=_VMEM_LIMIT),
    )(q, k, v, mask_bias)


# ----------------------------------------------------------------------------
# TPLinker handshaking: fused tanh(h_i + h_j) + concatenated classification heads
# ----------------------------------------------------------------------------
def _shake_heads_kernel(hi_ref, hj_ref, w_ref, b_ref, o_ref):
    s = jnp.tanh(hi_ref[...] + hj_ref[...]).astype(jnp.bfloat16)   # shaking stays in VMEM
    y = jnp.dot(s, w_ref[...], preferred_element_type=jnp.float32) + b_ref[...]
    o_ref[...] = y


def pallas_shake_heads(hi, hj, w, b, tile_m=256):
    """hi,hj: [M, H] f32 (pre-projected pair halves); w: [H, N] bf16 -> [M, N] f32."""
    M, H = hi.shape
    N = w.shape[1]
    tm = _pick_tile_m(M, tile_m)
    if tm is None:
        pad = (-M) % tile_m
        hi = jnp.pad(hi, ((0, pad), (0, 0)))
        hj = jnp.pad(hj, ((0, pad), (0, 0)))
        tm = tile_m
    Mp = hi.shape[0]
    out = pl.pallas_call(
        _shake_heads_kernel,
        out_shape=jax.ShapeDtypeStruct((Mp, N), jnp.float32),
        grid=(Mp // tm,),
        in_specs=[
            pl.BlockSpec((tm, H), lambda i: (i, 0)),
            pl.BlockSpec((tm, H), lambda i: (i, 0)),
            pl.BlockSpec((H, N), lambda i: (0, 0)),
            pl.BlockSpec((1, N), lambda i: (0, 0)),
        ],
        out_specs=pl.BlockSpec((tm, N), lambda i: (i, 0)),
        compiler_params=pltpu.CompilerParams(
            dimension_semantics=("parallel",),
            vmem_limit_bytes=_VMEM_LIMIT),
    )(hi, hj, w, b.reshape(1, N))
    return out[:M] if Mp != M else out


# ----------------------------------------------------------------------------
# Deterministic parameter init (synthetic weights, mirrors module shapes;
# matmul weights stored in bf16, norms/biases/embeddings in f32)
# ----------------------------------------------------------------------------
def init_params(key, cfg):
    H, I, R = cfg["hidden"], cfg["intermediate"], cfg["num_relations"]

    def nrm(k, shape, scale=0.02, dtype=jnp.bfloat16):
        return (scale * jax.random.normal(k, shape, dtype=jnp.float32)).astype(dtype)

    keys = iter(jax.random.split(key, 256))
    nk = lambda: next(keys)

    params = dict(
        word_emb=nrm(nk(), (cfg["vocab"], H), dtype=jnp.float32),
        pos_emb=nrm(nk(), (cfg["max_pos"], H), dtype=jnp.float32),
        type_emb=nrm(nk(), (cfg["type_vocab"], H), dtype=jnp.float32),
        emb_ln_g=jnp.ones((H,), jnp.float32),
        emb_ln_b=jnp.zeros((H,), jnp.float32),
        layers=[],
    )
    for _ in range(cfg["layers"]):
        params["layers"].append(dict(
            # fused QKV projection [H, 3H]
            wqkv=jnp.concatenate([nrm(nk(), (H, H)) for _ in range(3)], axis=1),
            bqkv=jnp.zeros((3 * H,), jnp.float32),
            wo=nrm(nk(), (H, H)), bo=jnp.zeros((H,), jnp.float32),
            ln1_g=jnp.ones((H,), jnp.float32), ln1_b=jnp.zeros((H,), jnp.float32),
            wi=nrm(nk(), (H, I)), bi=jnp.zeros((I,), jnp.float32),
            wo2=nrm(nk(), (I, H)), bo2=jnp.zeros((H,), jnp.float32),
            ln2_g=jnp.ones((H,), jnp.float32), ln2_b=jnp.zeros((H,), jnp.float32),
        ))
    # TPLinker: handshaking kernel split into the two [H,H] halves of the [2H,H]
    # weight (tanh(Wi h_i + Wj h_j + b)), plus fused ent/head/tail heads [H, 2+6R].
    params.update(
        w_shake_i=nrm(nk(), (H, H)),
        w_shake_j=nrm(nk(), (H, H)),
        b_shake=jnp.zeros((H,), jnp.float32),
        b_zero=jnp.zeros((H,), jnp.float32),
        w_cls=jnp.concatenate(
            [nrm(nk(), (H, 2)), nrm(nk(), (H, R * 3)), nrm(nk(), (H, R * 3))], axis=1),
        b_cls=jnp.zeros((2 + 6 * R,), jnp.float32),
    )
    return params


# ----------------------------------------------------------------------------
# Forward passes
# ----------------------------------------------------------------------------
def bert_forward(params, input_ids, attn_mask, token_type_ids, cfg):
    B, L = input_ids.shape
    H, Hn = cfg["hidden"], cfg["heads"]

    emb = (params["word_emb"][input_ids]
           + params["pos_emb"][:L][None, :, :]
           + params["type_emb"][token_type_ids])
    x = pallas_layernorm(emb.reshape(B * L, H),
                         params["emb_ln_g"], params["emb_ln_b"]).reshape(B, L, H)

    # additive attention-mask bias, computed once for all layers
    mask_bias = ((1.0 - attn_mask.astype(jnp.float32)) * (-1e9)).reshape(B, 1, L)

    for lyr in params["layers"]:
        x2 = x.reshape(B * L, H)
        qkv = pallas_linear(x2, lyr["wqkv"], lyr["bqkv"])                 # [B*L, 3H]
        q = qkv[:, :H].reshape(B, L, H)
        k = qkv[:, H:2 * H].reshape(B, L, H)
        v = qkv[:, 2 * H:].reshape(B, L, H)
        ctx = pallas_attention(q, k, v, mask_bias, Hn).reshape(B * L, H)
        attn_out = pallas_linear(ctx, lyr["wo"], lyr["bo"])
        x2 = pallas_layernorm(attn_out, lyr["ln1_g"], lyr["ln1_b"], residual=x2)
        inter = pallas_linear(x2, lyr["wi"], lyr["bi"], act="gelu")
        ffn_out = pallas_linear(inter, lyr["wo2"], lyr["bo2"])
        x2 = pallas_layernorm(ffn_out, lyr["ln2_g"], lyr["ln2_b"], residual=x2)
        x = x2.reshape(B, L, H)
    return x   # last_hidden_state, i.e. bert(...)[0]


def tplinker_forward(params, seq_out, num_relations):
    B, L, H = seq_out.shape
    idx_i, idx_j = np.triu_indices(L)                 # handshaking pairs, j >= i
    P = idx_i.shape[0]                                # L*(L+1)//2
    R = num_relations

    # Algebraic split of the handshaking kernel: project once per token (O(L)),
    # gather per pair (O(P)), tanh + fused classification heads in one kernel.
    x2 = seq_out.reshape(B * L, H)
    proj_i = pallas_linear(x2, params["w_shake_i"], params["b_shake"]).reshape(B, L, H)
    proj_j = pallas_linear(x2, params["w_shake_j"], params["b_zero"]).reshape(B, L, H)

    hi = proj_i[:, idx_i, :].reshape(B * P, H)
    hj = proj_j[:, idx_j, :].reshape(B * P, H)
    # TODO(synk): add_distance_embedding=False path only; distance-embedding add not implemented.

    logits = pallas_shake_heads(hi, hj, params["w_cls"], params["b_cls"]).reshape(B, P, -1)
    h2t = logits[..., :2]
    h2h = logits[..., 2:2 + 3 * R].reshape(B, P, R, 3).transpose(0, 2, 1, 3)
    t2t = logits[..., 2 + 3 * R:].reshape(B, P, R, 3).transpose(0, 2, 1, 3)
    return h2t, h2h, t2t


def tplinker_bert_forward(params, input_ids, attn_mask, token_type_ids, cfg):
    seq_out = bert_forward(params, input_ids, attn_mask, token_type_ids, cfg)
    return tplinker_forward(params, seq_out, cfg["num_relations"])


# ----------------------------------------------------------------------------
if __name__ == "__main__":
    cfg = dict(hidden=32, heads=4, layers=2, intermediate=64,
               vocab=100, type_vocab=2, max_pos=512, num_relations=3)
    B, L = 2, 8

    root = jax.random.PRNGKey(0)
    kparam, kid = jax.random.split(root)
    params = init_params(kparam, cfg)

    input_ids = jax.random.randint(kid, (B, L), 0, cfg["vocab"], dtype=jnp.int32)
    attn_mask = jnp.ones((B, L), dtype=jnp.int32)
    token_type_ids = jnp.zeros((B, L), dtype=jnp.int32)

    h2t, h2h, t2t = tplinker_bert_forward(params, input_ids, attn_mask, token_type_ids, cfg)
    jax.block_until_ready((h2t, h2h, t2t))

    P = L * (L + 1) // 2
    assert h2t.shape == (B, P, 2), h2t.shape
    assert h2h.shape == (B, cfg["num_relations"], P, 3), h2h.shape
    assert t2t.shape == (B, cfg["num_relations"], P, 3), t2t.shape
    assert jnp.all(jnp.isfinite(h2t)) and jnp.all(jnp.isfinite(h2h)) and jnp.all(jnp.isfinite(t2t))
    print("KERNEL_OK")
</pallas_src>

<mosaic_0001>
module attributes {stable_mosaic.version = 11 : i64} {
  func.func @_ln_kernel(%arg0: i32, %arg1: memref<16x32xf32, #tpu.memory_space<vmem>>, %arg2: memref<1x32xf32, #tpu.memory_space<vmem>>, %arg3: memref<1x32xf32, #tpu.memory_space<vmem>>, %arg4: memref<16x32xf32, #tpu.memory_space<vmem>>) attributes {dimension_semantics = [#tpu.dimension_semantics<parallel>], iteration_bounds = array<i64: 1>, scalar_prefetch = 0 : i64, scratch_operands = 0 : i64, tpu.core_type = #tpu.core_type<tc>, window_params = [{transform_indices = @transform_0, window_bounds = array<i64: 16, 32>}, {pipeline_mode = #tpu.pipeline_mode<synchronous>, transform_indices = @transform_1, window_bounds = array<i64: 1, 32>}, {pipeline_mode = #tpu.pipeline_mode<synchronous>, transform_indices = @transform_2, window_bounds = array<i64: 1, 32>}, {transform_indices = @transform_3, window_bounds = array<i64: 16, 32>}]} {
    %c0 = arith.constant 0 : index
    %c0_0 = arith.constant 0 : index
    %0 = vector.load %arg1[%c0, %c0_0] : memref<16x32xf32, #tpu.memory_space<vmem>>, vector<16x32xf32>
    %c0_1 = arith.constant 0 : index
    %c0_2 = arith.constant 0 : index
    %1 = vector.load %arg2[%c0_1, %c0_2] : memref<1x32xf32, #tpu.memory_space<vmem>>, vector<1x32xf32>
    %c0_3 = arith.constant 0 : index
    %c0_4 = arith.constant 0 : index
    %2 = vector.load %arg3[%c0_3, %c0_4] : memref<1x32xf32, #tpu.memory_space<vmem>>, vector<1x32xf32>
    %cst = arith.constant dense<0.000000e+00> : vector<16xf32>
    %3 = vector.multi_reduction <add>, %0, %cst [1] : vector<16x32xf32> to vector<16xf32>
    %4 = vector.shape_cast %3 : vector<16xf32> to vector<16x1xf32>
    %cst_5 = arith.constant 3.200000e+01 : f32
    %5 = vector.broadcast %cst_5 : f32 to vector<16x1xf32>
    %6 = arith.divf %4, %5 : vector<16x1xf32>
    %7 = vector.broadcast %6 : vector<16x1xf32> to vector<16x32xf32>
    %8 = arith.subf %0, %7 : vector<16x32xf32>
    %9 = arith.mulf %8, %8 : vector<16x32xf32>
    %cst_6 = arith.constant dense<0.000000e+00> : vector<16xf32>
    %10 = vector.multi_reduction <add>, %9, %cst_6 [1] : vector<16x32xf32> to vector<16xf32>
    %11 = vector.shape_cast %10 : vector<16xf32> to vector<16x1xf32>
    %cst_7 = arith.constant 3.200000e+01 : f32
    %12 = vector.broadcast %cst_7 : f32 to vector<16x1xf32>
    %13 = arith.divf %11, %12 : vector<16x1xf32>
    %14 = vector.broadcast %6 : vector<16x1xf32> to vector<16x32xf32>
    %15 = arith.subf %0, %14 : vector<16x32xf32>
    %cst_8 = arith.constant 9.99999996E-13 : f32
    %16 = vector.broadcast %cst_8 : f32 to vector<16x1xf32>
    %17 = arith.addf %13, %16 : vector<16x1xf32>
    %18 = math.rsqrt %17 : vector<16x1xf32>
    %19 = vector.broadcast %18 : vector<16x1xf32> to vector<16x32xf32>
    %20 = arith.mulf %15, %19 : vector<16x32xf32>
    %21 = vector.broadcast %1 : vector<1x32xf32> to vector<16x32xf32>
    %22 = arith.mulf %20, %21 : vector<16x32xf32>
    %23 = vector.broadcast %2 : vector<1x32xf32> to vector<16x32xf32>
    %24 = arith.addf %22, %23 : vector<16x32xf32>
    %c0_9 = arith.constant 0 : index
    %c0_10 = arith.constant 0 : index
    %25 = vector.load %arg4[%c0_9, %c0_10] : memref<16x32xf32, #tpu.memory_space<vmem>>, vector<16x32xf32>
    tpu.vector_store %arg4[%c0_9, %c0_10], %24 {strides = array<i32>} : memref<16x32xf32, #tpu.memory_space<vmem>>, vector<16x32xf32>,
    return
  }
  func.func @transform_0(%arg0: i32) -> (i32, i32) {
    %c0_i32 = arith.constant 0 : i32
    %c0_i32_0 = arith.constant 0 : i32
    return %arg0, %c0_i32 : i32, i32
  }
  func.func @transform_1(%arg0: i32) -> (i32, i32) {
    %c0_i32 = arith.constant 0 : i32
    %c0_i32_0 = arith.constant 0 : i32
    %c0_i32_1 = arith.constant 0 : i32
    return %c0_i32, %c0_i32_0 : i32, i32
  }
  func.func @transform_2(%arg0: i32) -> (i32, i32) {
    %c0_i32 = arith.constant 0 : i32
    %c0_i32_0 = arith.constant 0 : i32
    %c0_i32_1 = arith.constant 0 : i32
    return %c0_i32, %c0_i32_0 : i32, i32
  }
  func.func @transform_3(%arg0: i32) -> (i32, i32) {
    %c0_i32 = arith.constant 0 : i32
    %c0_i32_0 = arith.constant 0 : i32
    return %arg0, %c0_i32 : i32, i32
  }
}

</mosaic_0001>

<llo_original>
// kernel: tpu_custom_call.1
$region0: #{tpu_custom_call.1}
  #allocation0 [shape = 'u32[]', space=smem, size = 0x4, offset = 0x4, fixed_abs, tag = 'smem constant byte address 0x4 - core index']
  #allocation1 [shape = 'u32[72,128]{1,0:T(1,128)}', space=vmem, size = 0x9000, scoped, tag = 'internal scratch']
  %s0 = inlined_call_operand.hbm [shape: f32[16,32], index: 0, kind: input, shape index: {}]
  %s1 = inlined_call_operand.hbm [shape: f32[1,32], index: 1, kind: input, shape index: {}]
  %s2 = inlined_call_operand.vmem [shape: f32[1,32], index: 2, kind: input, shape index: {}]
  %s3 = inlined_call_operand.hbm [shape: f32[16,32], index: 3, kind: output, shape index: {}]
  %s4 = sld [smem:[#allocation0]]
  $region30: #{tpu_custom_call.1} parent=0
    _
  %s6 = ssub.s32 1, %s4
  %s7 = scalar_select 0, %s6, %s4
  $region1: #{tpu_custom_call.1} parent=0
    #allocation2 [shape = 'u8[8192]{0}', space=vmem, size = 0x2000, scoped, tag = 'input window, operand 0, single buffered']
    #allocation3 [shape = 's32[1]{0}', space=sflag, size = 0x4, scoped, tag = 'scoped memory for tpu_custom_call.1']
    #allocation4 [shape = 's32[1]{0}', space=sflag, size = 0x4, scoped, tag = 'scoped memory for tpu_custom_call.1']
    #allocation5 [shape = 'u8[512]{0}', space=vmem, size = 0x400, scoped, tag = 'input window, operand 1, single buffered']
    #allocation6 [shape = 's32[1]{0}', space=sflag, size = 0x4, scoped, tag = 'scoped memory for tpu_custom_call.1']
    #allocation7 [shape = 'u8[8192]{0}', space=vmem, size = 0x2000, scoped, tag = 'output window, operand 0, single buffered']
    %8 = vsyncpa [#allocation3], 0
    %9 = vsyncpa [#allocation6], 0
    %10 = vsyncpa [#allocation4], 0
    // Predicated region
    $region2: #{tpu_custom_call.1} parent=1 // pred_check
      _
    $region3: #{tpu_custom_call.1} parent=1 // pred_check_branch
      %12 = sbr.rel (0) target = $region5
    $region4: #{tpu_custom_call.1} parent=1 // pred_region
      %14 = vsyncadd [#allocation3], 0
      %s15 = sshll.u32 %s0, 4
      %s16 = int_to_ptr.hbm [resolvable:$true] %s15
      %s17 = sshll.u32 [#allocation2], 4
      %s18 = int_to_ptr.vmem [resolvable:$true] %s17
      %23 = dma.hbm_to_vmem [thread:$0]  %s16, 256, %s18, [#allocation3], 128, 128, 8
    $region5: #{tpu_custom_call.1} parent=1 // pred_fallthru
      _
    // Predicated region
    $region6: #{tpu_custom_call.1} parent=1 // pred_check
      _
    $region7: #{tpu_custom_call.1} parent=1 // pred_check_branch
      %25 = sbr.rel (0) target = $region9
    $region8: #{tpu_custom_call.1} parent=1 // pred_region
      %27 = vsyncadd [#allocation6], 0
      %s29 = sshll.u32 %s1, 4
      %s30 = int_to_ptr.hbm [resolvable:$true] %s29
      %s31 = sshll.u32 [#allocation5], 4
      %s32 = int_to_ptr.vmem [resolvable:$true] %s31
      %34 = dma.hbm_to_vmem [thread:$0]  %s30, 16, %s32, [#allocation6]
    $region9: #{tpu_custom_call.1} parent=1 // pred_fallthru
      _
    // Predicated region
    $region10: #{tpu_custom_call.1} parent=1 // pred_check
      _
    $region11: #{tpu_custom_call.1} parent=1 // pred_check_branch
      %36 = sbr.rel (0) target = $region13
    $region12: #{tpu_custom_call.1} parent=1 // pred_region
      _
    $region13: #{tpu_custom_call.1} parent=1 // pred_fallthru
      _
    // Predicated region
    $region14: #{tpu_custom_call.1} parent=1 // pred_check
      _
    $region15: #{tpu_custom_call.1} parent=1 // pred_check_branch
      %38 = sbr.rel (0) target = $region17
    $region16: #{tpu_custom_call.1} parent=1 // pred_region
      %40 = dma.done [#allocation3], 256
    $region17: #{tpu_custom_call.1} parent=1 // pred_fallthru
      _
    // Predicated region
    $region18: #{tpu_custom_call.1} parent=1 // pred_check
      _
    $region19: #{tpu_custom_call.1} parent=1 // pred_check_branch
      %42 = sbr.rel (0) target = $region21
    $region20: #{tpu_custom_call.1} parent=1 // pred_region
      %44 = dma.done [#allocation6], 16
    $region21: #{tpu_custom_call.1} parent=1 // pred_fallthru
      _
    %v45 = vld [vmem:[#allocation2] sm:$0xff]
    %v46 = vld [vmem:[#allocation2 + $0x8] sm:$0xff]
    %v47 = vld [vmem:[#allocation5] sm:$0x1]
    %v48 = vld [vmem:[%s2] sm:$0x1]
    %vm49 = vcmask 261120
    %v50 = vsel %vm49, %v45, 0.0
    %51 = vadd.xlane.f32.xlu0 %v50
    %v52 = vpop.xlane.xlu0 %51
    %v53 = vsel %vm49, %v46, 0.0
    %54 = vadd.xlane.f32.xlu0 %v53
    %v55 = vpop.xlane.xlu0 %54
    %v56 = vrcp.pop 32.0
    %v57 = vmul.f32 32.0, %v56
    %v58 = vsub.f32 1.0, %v57
    %v59 = vmul.f32 %v56, %v58
    %v60 = vadd.f32 %v56, %v59
    %vm61 = vweird.f32 %v56
    %v62 = vsel %vm61, %v56, %v60
    %v63 = vmul.f32 %v52, %v62
    %v64 = vmul.f32 %v55, %v62
    %v65 = vsub.f32 %v45, %v63
    %v66 = vsub.f32 %v46, %v64
    %v67 = vmul.f32 %v65, %v65
    %v68 = vmul.f32 %v66, %v66
    %v69 = vsel %vm49, %v67, 0.0
    %70 = vadd.xlane.f32.xlu0 %v69
    %v71 = vpop.xlane.xlu0 %70
    %v72 = vsel %vm49, %v68, 0.0
    %73 = vadd.xlane.f32.xlu0 %v72
    %v74 = vpop.xlane.xlu0 %73
    %v75 = vmul.f32 %v71, %v62
    %v76 = vmul.f32 %v74, %v62
    %v77 = vadd.f32 %v75, 1e-12
    %v78 = vadd.f32 %v76, 1e-12
    %v79 = vrsqrt.pop %v77
    %v80 = vmul.f32 %v79, %v77
    %v81 = vmul.f32 %v80, %v79
    %v82 = vmul.f32 0.5, %v81
    %v83 = vsub.f32 1.5, %v82
    %v84 = vmul.f32 %v79, %v83
    %vm85 = vweird.f32 %v77
    %vm86 = vweird.f32 %v79
    %vm87 = vmor %vm85, %vm86
    %v88 = vsel %vm87, %v79, %v84
    %v89 = vrsqrt.pop %v78
    %v90 = vmul.f32 %v89, %v78
    %v91 = vmul.f32 %v90, %v89
    %v92 = vmul.f32 0.5, %v91
    %v93 = vsub.f32 1.5, %v92
    %v94 = vmul.f32 %v89, %v93
    %vm95 = vweird.f32 %v78
    %vm96 = vweird.f32 %v89
    %vm97 = vmor %vm95, %vm96
    %v98 = vsel %vm97, %v89, %v94
    %v99 = vmul.f32 %v65, %v88
    %v100 = vmul.f32 %v66, %v98
    %v102 = vperm.slane %v47, 0
    %v104 = vmul.f32 %v99, %v102
    %v105 = vmul.f32 %v100, %v102
    %v107 = vperm.slane %v48, 0
    %v109 = vadd.f32 %v104, %v107
    %v110 = vadd.f32 %v105, %v107
    %111 = vst.msk [vmem:[#allocation7] sm:$0xff] %vm49, %v109
    %112 = vst.msk [vmem:[#allocation7 + $0x8] sm:$0xff] %vm49, %v110
    // Predicated region
    $region22: #{tpu_custom_call.1} parent=1 // pred_check
      _
    $region23: #{tpu_custom_call.1} parent=1 // pred_check_branch
      %114 = sbr.rel (0) target = $region25
    $region24: #{tpu_custom_call.1} parent=1 // pred_region
      %116 = vsyncadd [#allocation4], 0
      %s117 = sshll.u32 [#allocation7], 4
      %s118 = int_to_ptr.vmem [resolvable:$true] %s117
      %s119 = sshll.u32 %s3, 4
      %s120 = int_to_ptr.hbm [resolvable:$true] %s119
      %125 = dma.vmem_to_hbm [thread:$0]  %s118, 256, %s120, [#allocation4], 128, 128, 8
    $region25: #{tpu_custom_call.1} parent=1 // pred_fallthru
      _
    // Predicated region
    $region26: #{tpu_custom_call.1} parent=1 // pred_check
      _
    $region27: #{tpu_custom_call.1} parent=1 // pred_check_branch
      %127 = sbr.rel (0) target = $region29
    $region28: #{tpu_custom_call.1} parent=1 // pred_region
      %129 = dma.done [#allocation4], 256
    $region29: #{tpu_custom_call.1} parent=1 // pred_fallthru
      _
    %130 = vsyncpa [#allocation3], 1
    %131 = vsyncpa [#allocation6], 1
    %132 = vsyncpa [#allocation4], 1

</llo_original>
